<compile_context>
chip_gen: v7x
topology: tpu7x:2x2x1
jax: 0.10.0
libtpu: 0.0.40
codegen_flags: <defaults>
</compile_context>

<pallas_src>
import functools

import numpy as np

import jax
import jax.numpy as jnp
from jax import lax
from jax.experimental import pallas as pl
from jax.experimental.pallas import tpu as pltpu

_MIB = 1024 * 1024


def _round_up(x, m):
    return ((x + m - 1) // m) * m


@functools.lru_cache(maxsize=None)
def _vmem_capacity_bytes():
    """Physical per-core VMEM; conservative fallback (v7x = 64 MiB) on failure."""
    try:
        cap = getattr(pltpu.get_tpu_info(), "vmem_capacity_bytes", None)
        if cap:
            return int(cap)
    except Exception:
        pass
    return 64 * _MIB


@functools.lru_cache(maxsize=None)
def _single_buffer_supported():
    """Probe whether pipeline_mode=pl.Buffered(1) compiles/runs correctly here."""
    if not hasattr(pl, "Buffered"):
        return False

    def _copy(x_ref, o_ref):
        o_ref[...] = x_ref[...]

    try:
        f = pl.pallas_call(
            _copy,
            out_shape=jax.ShapeDtypeStruct((8, 128), jnp.float32),
            grid=(2,),
            in_specs=[pl.BlockSpec((8, 128), lambda i: (0, 0),
                                   pipeline_mode=pl.Buffered(1))],
            out_specs=pl.BlockSpec((8, 128), lambda i: (0, 0)),
        )
        x = jnp.arange(8 * 128, dtype=jnp.float32).reshape(8, 128)
        y = jax.block_until_ready(f(x))
        return bool(jnp.array_equal(y, x))
    except Exception:
        return False


def _pick_h_chunk(hp, max_chunk=1024):
    """Largest lane-aligned chunk of the hidden dim that divides Hp."""
    if hp <= max_chunk:
        return hp
    for c in (1024, 512, 256, 128):
        if c <= max_chunk and hp % c == 0:
            return c
    return 128


def _vmem_estimate(tm, dp, hp, h_chunk, x_itemsize, out_itemsize, wbuf):
    xtile = 2 * tm * dp * x_itemsize            # double-buffered x tiles
    otile = 2 * tm * dp * out_itemsize          # double-buffered out tiles
    weights = wbuf * (dp * hp + hp * dp) * 2    # bf16 W1 + W2 (resident)
    biases = wbuf * (hp + dp) * 4               # f32 biases
    interm = tm * dp * 2                        # bf16 copy of the x tile
    interm += tm * h_chunk * (4 + 2)            # f32 hidden chunk + bf16 copy
    interm += tm * dp * 4                       # f32 accumulator / result
    return xtile + otile + weights + biases + interm


def _make_ffn_kernel(dp, hp, h_chunk, activation):
    n_chunks = hp // h_chunk

    if activation == "relu":
        nonlin = lambda v: jnp.maximum(v, 0.0)
    elif activation == "gelu":
        # tanh-approximate GELU (EUP tanh). TODO(synk): exact erf GELU.
        nonlin = lambda v: jax.nn.gelu(v, approximate=True)
    else:
        raise ValueError(f"unsupported activation: {activation}")

    def kernel(x_ref, w1_ref, b1_ref, w2_ref, b2_ref, o_ref):
        # Cast to bf16 in-kernel (cheap VPU op, hidden under the matmuls).
        xb = x_ref[...].astype(jnp.bfloat16)
        # relu_dropout has p=0 (module default) -> identity at inference.
        # TODO(synk): training-mode dropout (p>0) would need pltpu.prng_seed +
        # pltpu.prng_random_bits masking per tile; omitted since p=0.
        if n_chunks == 1:
            h = jnp.dot(xb, w1_ref[...], preferred_element_type=jnp.float32)
            h = nonlin(h + b1_ref[...])
            y = jnp.dot(h.astype(jnp.bfloat16), w2_ref[...],
                        preferred_element_type=jnp.float32)
            o_ref[...] = (y + b2_ref[...]).astype(o_ref.dtype)
        else:
            tm = x_ref.shape[0]

            def body(c, acc):
                start = pl.multiple_of(c * h_chunk, h_chunk)
                h = jnp.dot(xb, w1_ref[:, pl.ds(start, h_chunk)],
                            preferred_element_type=jnp.float32)
                h = nonlin(h + b1_ref[:, pl.ds(start, h_chunk)])
                return acc + jnp.dot(h.astype(jnp.bfloat16),
                                     w2_ref[pl.ds(start, h_chunk), :],
                                     preferred_element_type=jnp.float32)

            acc = lax.fori_loop(0, n_chunks, body,
                                jnp.zeros((tm, dp), jnp.float32),
                                unroll=n_chunks <= 4)
            o_ref[...] = (acc + b2_ref[...]).astype(o_ref.dtype)

    return kernel


@functools.partial(
    jax.jit,
    static_argnames=("m", "d", "h", "mp", "dp", "hp", "tm_eff", "h_chunk",
                     "vmem_limit", "single_buffer", "activation", "out_dtype"))
def _ffn_impl(x2, w1, b1, w2, b2, *, m, d, h, mp, dp, hp, tm_eff, h_chunk,
              vmem_limit, single_buffer, activation, out_dtype):
    x_itemsize = x2.dtype.itemsize
    out_itemsize = out_dtype.itemsize

    # Pad only when needed; in the production case (D % 128 == 0, M aligned)
    # x is passed through untouched in its original dtype.
    if mp != m or dp != d:
        x2 = jnp.pad(x2, ((0, mp - m), (0, dp - d)))
    w1_p = w1.astype(jnp.bfloat16)
    w2_p = w2.astype(jnp.bfloat16)
    if dp != d or hp != h:
        w1_p = jnp.pad(w1_p, ((0, dp - d), (0, hp - h)))
        w2_p = jnp.pad(w2_p, ((0, hp - h), (0, dp - d)))
    b1_p = jnp.pad(b1.astype(jnp.float32), (0, hp - h)).reshape(1, hp)
    b2_p = jnp.pad(b2.astype(jnp.float32), (0, dp - d)).reshape(1, dp)

    def resident_spec(shape):
        # Constant index map -> fetched once; with Buffered(1) we also avoid
        # allocating a pointless second buffer for these operands.
        if single_buffer:
            return pl.BlockSpec(shape, lambda i: (0, 0),
                                pipeline_mode=pl.Buffered(1))
        return pl.BlockSpec(shape, lambda i: (0, 0))

    cost = pl.CostEstimate(
        flops=4 * mp * dp * hp,                         # two matmuls
        transcendentals=(mp * hp if activation == "gelu" else 0),
        bytes_accessed=(mp * dp * x_itemsize + dp * hp * 2 + hp * dp * 2
                        + (hp + dp) * 4 + mp * dp * out_itemsize),
    )

    out_p = pl.pallas_call(
        _make_ffn_kernel(dp, hp, h_chunk, activation),
        out_shape=jax.ShapeDtypeStruct((mp, dp), out_dtype),
        grid_spec=pltpu.PrefetchScalarGridSpec(
            num_scalar_prefetch=0,
            grid=(mp // tm_eff,),
            in_specs=[
                pl.BlockSpec((tm_eff, dp), lambda i: (i, 0)),   # x tile
                resident_spec((dp, hp)),                        # W1
                resident_spec((1, hp)),                         # b1
                resident_spec((hp, dp)),                        # W2
                resident_spec((1, dp)),                         # b2
            ],
            out_specs=pl.BlockSpec((tm_eff, dp), lambda i: (i, 0)),
        ),
        compiler_params=pltpu.CompilerParams(
            dimension_semantics=("parallel",),
            vmem_limit_bytes=vmem_limit,
        ),
        cost_estimate=cost,
    )(x2, w1_p, b1_p, w2_p, b2_p)

    return out_p[:m, :d]


def transformer_ffn(x, w1, b1, w2, b2, *, tm=512, activation="relu",
                    relu_dropout=0.0, out_dtype=None):
    """Fused TransformerFFN forward.

    x: [..., D]; w1: [D, H]; b1: [H]; w2: [H, D]; b2: [D].
    (w1/w2 are the transposed torch nn.Linear weights.)
    """
    if relu_dropout != 0.0:
        # TODO(synk): training-mode dropout needs in-kernel PRNG masking.
        raise NotImplementedError("relu_dropout > 0 not supported")

    orig_shape = x.shape
    d = orig_shape[-1]
    h = w1.shape[1]
    m = 1
    for s in orig_shape[:-1]:
        m *= s
    if out_dtype is None:
        out_dtype = x.dtype
    out_dtype = np.dtype(out_dtype)
    x_itemsize = np.dtype(x.dtype).itemsize
    out_itemsize = out_dtype.itemsize

    dp = _round_up(d, 128)
    hp = _round_up(h, 128)
    h_chunk = _pick_h_chunk(hp)

    single_buffer = _single_buffer_supported()
    wbuf = 1 if single_buffer else 2

    cap = _vmem_capacity_bytes()
    budget = int(0.85 * cap)      # headroom for Mosaic internal scratch

    m8 = _round_up(max(m, 1), 8)
    tm_eff = min(_round_up(tm, 8), m8)
    # Shrink the M tile until the footprint fits the per-generation budget.
    while tm_eff > 8 and _vmem_estimate(tm_eff, dp, hp, h_chunk,
                                        x_itemsize, out_itemsize,
                                        wbuf) > budget:
        tm_eff = max(8, _round_up(tm_eff // 2, 8))
    # Prefer >= 2 grid steps so both TensorCores get work on v7x.
    if m8 > 8 and -(-m8 // tm_eff) < 2:
        tm_eff = _round_up(-(-m8 // 2), 8)
    mp = _round_up(m8, tm_eff)

    est = _vmem_estimate(tm_eff, dp, hp, h_chunk, x_itemsize, out_itemsize,
                         wbuf)
    # TODO(synk): if the resident bf16 weights alone exceed `budget`
    # (very large D/H on v7x's 64 MiB VMEM), stream W1/W2 over a second
    # "arbitrary" grid axis into an f32 accumulator instead of residency.
    vmem_limit = int(min(max(est + est // 2 + 4 * _MIB, 16 * _MIB), budget))

    out2 = _ffn_impl(x.reshape(m, d), w1, b1, w2, b2,
                     m=m, d=d, h=h, mp=mp, dp=dp, hp=hp, tm_eff=tm_eff,
                     h_chunk=h_chunk, vmem_limit=vmem_limit,
                     single_buffer=single_buffer, activation=activation,
                     out_dtype=out_dtype)
    return out2.reshape(orig_shape)


def xavier_uniform(key, shape):
    # shape = (fan_out, fan_in) as in torch nn.Linear.weight
    fan_out, fan_in = shape
    bound = (6.0 / (fan_in + fan_out)) ** 0.5
    return jax.random.uniform(key, shape, jnp.float32, -bound, bound)


def linear_bias_init(key, fan_in, fan_out):
    # torch nn.Linear default bias init: U(-1/sqrt(fan_in), 1/sqrt(fan_in))
    bound = 1.0 / (fan_in ** 0.5)
    return jax.random.uniform(key, (fan_out,), jnp.float32, -bound, bound)


if __name__ == "__main__":
    # opt['embedding_size'] = 32, opt['ffn_size'] = 64
    B, S, D, H = 2, 8, 32, 64

    key = jax.random.PRNGKey(0)
    kx, kw1, kb1, kw2, kb2 = jax.random.split(key, 5)

    x = jax.random.normal(kx, (B, S, D), jnp.float32)

    # PyTorch weights are [out, in]; transpose for right-multiply in kernel.
    w1_t = xavier_uniform(kw1, (H, D))        # lin1.weight
    b1 = linear_bias_init(kb1, D, H)          # lin1.bias
    w2_t = xavier_uniform(kw2, (D, H))        # lin2.weight
    b2 = linear_bias_init(kb2, H, D)          # lin2.bias

    w1 = w1_t.T                               # (D, H)
    w2 = w2_t.T                               # (H, D)

    y = transformer_ffn(x, w1, b1, w2, b2)
    y = jax.block_until_ready(y)
    assert y.shape == (B, S, D)
    assert y.dtype == x.dtype

    # Reference 1: same bf16 matmul inputs / f32 accumulation as the kernel.
    xb = x.astype(jnp.bfloat16)
    h_ref = jnp.maximum(
        jnp.dot(xb, w1.astype(jnp.bfloat16),
                preferred_element_type=jnp.float32) + b1, 0.0)
    y_ref = jnp.dot(h_ref.astype(jnp.bfloat16), w2.astype(jnp.bfloat16),
                    preferred_element_type=jnp.float32) + b2
    assert jnp.allclose(y, y_ref, atol=1e-2, rtol=1e-2), \
        float(jnp.max(jnp.abs(y - y_ref)))

    # Reference 2: pure f32 math (loose tolerance due to bf16 matmul inputs).
    y32 = jnp.maximum(x @ w1 + b1, 0.0) @ w2 + b2
    assert jnp.allclose(y, y32, atol=5e-2, rtol=5e-2)

    print("KERNEL_OK")
</pallas_src>

<mosaic_0001>
module attributes {stable_mosaic.version = 11 : i64} {
  func.func @_copy(%arg0: i32, %arg1: memref<8x128xf32, #tpu.memory_space<vmem>>, %arg2: memref<8x128xf32, #tpu.memory_space<vmem>>) attributes {dimension_semantics = [#tpu.dimension_semantics<arbitrary>], iteration_bounds = array<i64: 2>, scalar_prefetch = 0 : i64, scratch_operands = 0 : i64, tpu.core_type = #tpu.core_type<tc>, window_params = [{pipeline_mode = #tpu.pipeline_mode<synchronous>, transform_indices = @transform_0, window_bounds = array<i64: 8, 128>}, {pipeline_mode = #tpu.pipeline_mode<synchronous>, transform_indices = @transform_1, window_bounds = array<i64: 8, 128>}]} {
    %c0 = arith.constant 0 : index
    %c0_0 = arith.constant 0 : index
    %0 = vector.load %arg1[%c0, %c0_0] : memref<8x128xf32, #tpu.memory_space<vmem>>, vector<8x128xf32>
    %c0_1 = arith.constant 0 : index
    %c0_2 = arith.constant 0 : index
    %1 = vector.load %arg2[%c0_1, %c0_2] : memref<8x128xf32, #tpu.memory_space<vmem>>, vector<8x128xf32>
    tpu.vector_store %arg2[%c0_1, %c0_2], %0 {strides = array<i32>} : memref<8x128xf32, #tpu.memory_space<vmem>>, vector<8x128xf32>,
    return
  }
  func.func @transform_0(%arg0: i32) -> (i32, i32) {
    %c0_i32 = arith.constant 0 : i32
    %c0_i32_0 = arith.constant 0 : i32
    %c0_i32_1 = arith.constant 0 : i32
    return %c0_i32, %c0_i32_0 : i32, i32
  }
  func.func @transform_1(%arg0: i32) -> (i32, i32) {
    %c0_i32 = arith.constant 0 : i32
    %c0_i32_0 = arith.constant 0 : i32
    %c0_i32_1 = arith.constant 0 : i32
    return %c0_i32, %c0_i32_0 : i32, i32
  }
}

module attributes {stable_mosaic.version = 11 : i64} {
  func.func @kernel(%arg0: i32, %arg1: memref<8x128xf32, #tpu.memory_space<vmem>>, %arg2: memref<128x128xbf16, #tpu.memory_space<vmem>>, %arg3: memref<1x128xf32, #tpu.memory_space<vmem>>, %arg4: memref<128x128xbf16, #tpu.memory_space<vmem>>, %arg5: memref<1x128xf32, #tpu.memory_space<vmem>>, %arg6: memref<8x128xf32, #tpu.memory_space<vmem>>) attributes {dimension_semantics = [#tpu.dimension_semantics<parallel>], iteration_bounds = array<i64: 2>, scalar_prefetch = 0 : i64, scratch_operands = 0 : i64, tpu.core_type = #tpu.core_type<tc>, window_params = [{transform_indices = @transform_0, window_bounds = array<i64: 8, 128>}, {pipeline_mode = #tpu.pipeline_mode<synchronous>, transform_indices = @transform_1, window_bounds = array<i64: 128, 128>}, {pipeline_mode = #tpu.pipeline_mode<synchronous>, transform_indices = @transform_2, window_bounds = array<i64: 1, 128>}, {pipeline_mode = #tpu.pipeline_mode<synchronous>, transform_indices = @transform_3, window_bounds = array<i64: 128, 128>}, {pipeline_mode = #tpu.pipeline_mode<synchronous>, transform_indices = @transform_4, window_bounds = array<i64: 1, 128>}, {transform_indices = @transform_5, window_bounds = array<i64: 8, 128>}]} {
    %c0 = arith.constant 0 : index
    %c0_0 = arith.constant 0 : index
    %0 = vector.load %arg1[%c0, %c0_0] : memref<8x128xf32, #tpu.memory_space<vmem>>, vector<8x128xf32>
    %1 = arith.truncf %0 : vector<8x128xf32> to vector<8x128xbf16>
    %c0_1 = arith.constant 0 : index
    %c0_2 = arith.constant 0 : index
    %2 = vector.load %arg2[%c0_1, %c0_2] : memref<128x128xbf16, #tpu.memory_space<vmem>>, vector<128x128xbf16>
    %cst = arith.constant dense<0.000000e+00> : vector<8x128xf32>
    %3 = tpu.matmul %1, %2, %cst {dimension_numbers = #tpu.dot_dimension_numbers<[1], [0], [0], [1], [0, 0, 1, 1], [], []>} : vector<8x128xbf16>, vector<128x128xbf16>, vector<8x128xf32> -> vector<8x128xf32>
    %c0_3 = arith.constant 0 : index
    %c0_4 = arith.constant 0 : index
    %4 = vector.load %arg3[%c0_3, %c0_4] : memref<1x128xf32, #tpu.memory_space<vmem>>, vector<1x128xf32>
    %5 = vector.broadcast %4 : vector<1x128xf32> to vector<8x128xf32>
    %6 = arith.addf %3, %5 : vector<8x128xf32>
    %cst_5 = arith.constant 0.000000e+00 : f32
    %7 = vector.broadcast %cst_5 : f32 to vector<8x128xf32>
    %8 = arith.maximumf %6, %7 : vector<8x128xf32>
    %9 = arith.truncf %8 : vector<8x128xf32> to vector<8x128xbf16>
    %c0_6 = arith.constant 0 : index
    %c0_7 = arith.constant 0 : index
    %10 = vector.load %arg4[%c0_6, %c0_7] : memref<128x128xbf16, #tpu.memory_space<vmem>>, vector<128x128xbf16>
    %cst_8 = arith.constant dense<0.000000e+00> : vector<8x128xf32>
    %11 = tpu.matmul %9, %10, %cst_8 {dimension_numbers = #tpu.dot_dimension_numbers<[1], [0], [0], [1], [0, 0, 1, 1], [], []>} : vector<8x128xbf16>, vector<128x128xbf16>, vector<8x128xf32> -> vector<8x128xf32>
    %c0_9 = arith.constant 0 : index
    %c0_10 = arith.constant 0 : index
    %12 = vector.load %arg5[%c0_9, %c0_10] : memref<1x128xf32, #tpu.memory_space<vmem>>, vector<1x128xf32>
    %13 = vector.broadcast %12 : vector<1x128xf32> to vector<8x128xf32>
    %14 = arith.addf %11, %13 : vector<8x128xf32>
    %c0_11 = arith.constant 0 : index
    %c0_12 = arith.constant 0 : index
    %15 = vector.load %arg6[%c0_11, %c0_12] : memref<8x128xf32, #tpu.memory_space<vmem>>, vector<8x128xf32>
    tpu.vector_store %arg6[%c0_11, %c0_12], %14 {strides = array<i32>} : memref<8x128xf32, #tpu.memory_space<vmem>>, vector<8x128xf32>,
    return
  }
  func.func @transform_0(%arg0: i32) -> (i32, i32) {
    %c0_i32 = arith.constant 0 : i32
    %c0_i32_0 = arith.constant 0 : i32
    return %arg0, %c0_i32 : i32, i32
  }
  func.func @transform_1(%arg0: i32) -> (i32, i32) {
    %c0_i32 = arith.constant 0 : i32
    %c0_i32_0 = arith.constant 0 : i32
    %c0_i32_1 = arith.constant 0 : i32
    return %c0_i32, %c0_i32_0 : i32, i32
  }
  func.func @transform_2(%arg0: i32) -> (i32, i32) {
    %c0_i32 = arith.constant 0 : i32
    %c0_i32_0 = arith.constant 0 : i32
    %c0_i32_1 = arith.constant 0 : i32
    return %c0_i32, %c0_i32_0 : i32, i32
  }
  func.func @transform_3(%arg0: i32) -> (i32, i32) {
    %c0_i32 = arith.constant 0 : i32
    %c0_i32_0 = arith.constant 0 : i32
    %c0_i32_1 = arith.constant 0 : i32
    return %c0_i32, %c0_i32_0 : i32, i32
  }
  func.func @transform_4(%arg0: i32) -> (i32, i32) {
    %c0_i32 = arith.constant 0 : i32
    %c0_i32_0 = arith.constant 0 : i32
    %c0_i32_1 = arith.constant 0 : i32
    return %c0_i32, %c0_i32_0 : i32, i32
  }
  func.func @transform_5(%arg0: i32) -> (i32, i32) {
    %c0_i32 = arith.constant 0 : i32
    %c0_i32_0 = arith.constant 0 : i32
    return %arg0, %c0_i32 : i32, i32
  }
}

</mosaic_0001>

<llo_original>
// kernel: tpu_custom_call.1
$region0: #{tpu_custom_call.1}
  #allocation0 [shape = 'u32[]', space=smem, size = 0x4, offset = 0x4, fixed_abs, tag = 'smem constant byte address 0x4 - core index']
  #allocation1 [shape = 'u32[144,128]{1,0:T(1,128)}', space=vmem, size = 0x12000, scoped, tag = 'internal scratch']
  %s0 = inlined_call_operand.hbm [shape: f32[8,128], index: 0, kind: input, shape index: {}]
  %s1 = inlined_call_operand.hbm [shape: f32[8,128], index: 1, kind: output, shape index: {}]
  %s2 = sld [smem:[#allocation0]]
  $region41: #{tpu_custom_call.1} parent=0
    _
  %s4 = ssub.s32 1, %s2
  %s5 = scalar_select 0, %s4, %s2
  $region1: #{tpu_custom_call.1} parent=0
    #allocation2 [shape = 'u8[4096]{0}', space=vmem, size = 0x1000, scoped, tag = 'input window, operand 0, single buffered']
    #allocation3 [shape = 's32[2]{0}', space=sflag, size = 0x8, scoped, tag = 'scoped memory for tpu_custom_call.1']
    #allocation4 [shape = 's32[2]{0}', space=sflag, size = 0x8, scoped, tag = 'scoped memory for tpu_custom_call.1']
    #allocation5 [shape = 'u8[4096]{0}', space=vmem, size = 0x1000, scoped, tag = 'output window, operand 0, single buffered']
    %6 = vsyncpa [#allocation3], 0
    %7 = vsyncpa [#allocation4], 0
    loop: start=0, step=1, limit=4
    $region2: #{tpu_custom_call.1} parent=1 // loop_pre_header
      _
    $region3: #{tpu_custom_call.1} parent=1 // loop_header
      %s9 = sphi 0, %s13
      %p10 = scmp.ge.s32.totalorder %s9, 4
      %s17 = sphi 0, %s17
      %s19 = sphi 0, %s17
      %s20 = sphi 0, %s19
      %s34 = sphi 0, %s20
      %s38 = sphi 0, %s38
      %s40 = sphi 0, %s38
      %s41 = sphi 0, %s40
      %s55 = sphi 0, %s41
    $region4: #{tpu_custom_call.1} parent=1 // loop_header_branch
      %12 = sbr.rel (%p10) target = $region8
    $region5: #{tpu_custom_call.1} parent=1 // loop_body
      %s14 = ssub.s32 %s9, 1
      %s15 = ssub.s32 %s9, 2
      %s16 = sadd.s32 %s9, 1
      %s18 = sadd.s32 %s17, 1
      %p21 = scmp.eq.s32.totalorder %s9, 1
      %p22 = scmp.ne.s32.totalorder %s17, %s19
      %p23 = scmp.eq.s32.totalorder %s9, 0
      %p24 = por %p22, %p23
      %p25 = scmp.ne.s32.totalorder %s17, %s19
      %p26 = scmp.eq.s32.totalorder %s14, 1
      %p27 = por %p25, %p26
      %p28 = scmp.ne.s32.totalorder %s19, %s20
      %p29 = scmp.eq.s32.totalorder %s14, 0
      %p30 = por %p28, %p29
      %p31 = scmp.ne.s32.totalorder %s19, %s20
      %p32 = scmp.eq.s32.totalorder %s15, 1
      %p33 = por %p31, %p32
      %p35 = scmp.ne.s32.totalorder %s20, %s34
      %p36 = scmp.eq.s32.totalorder %s15, 0
      %p37 = por %p35, %p36
      %s39 = sadd.s32 %s38, 1
      %p42 = scmp.eq.s32.totalorder %s9, 1
      %p43 = scmp.ne.s32.totalorder %s38, %s40
      %p44 = scmp.eq.s32.totalorder %s9, 0
      %p45 = por %p43, %p44
      %p46 = scmp.ne.s32.totalorder %s38, %s40
      %p47 = scmp.eq.s32.totalorder %s14, 1
      %p48 = por %p46, %p47
      %p49 = scmp.ne.s32.totalorder %s40, %s41
      %p50 = scmp.eq.s32.totalorder %s14, 0
      %p51 = por %p49, %p50
      %p52 = scmp.ne.s32.totalorder %s40, %s41
      %p53 = scmp.eq.s32.totalorder %s15, 1
      %p54 = por %p52, %p53
      %p56 = scmp.ne.s32.totalorder %s41, %s55
      %p57 = scmp.eq.s32.totalorder %s15, 0
      %p58 = por %p56, %p57
      %p59 = scmp.le.s32.totalorder 1, %s9
      %p60 = scmp.lt.s32.totalorder %s9, 3
      %p61 = pnand %p59, %p60
      %p62 = pneg %p61
      // Predicated region
      $region9: #{tpu_custom_call.1} parent=5 // pred_check
        _
      $region10: #{tpu_custom_call.1} parent=5 // pred_check_branch
        %64 = sbr.rel (%p61) target = $region12
      $region11: #{tpu_custom_call.1} parent=5 // pred_region
        %s65 = ssub.s32 %s9, 1
        // Predicated region
        $region13: #{tpu_custom_call.1} parent=11 // pred_check
          %p66 = pneg %p30
        $region14: #{tpu_custom_call.1} parent=11 // pred_check_branch
          %68 = sbr.rel (%p66) target = $region16
        $region15: #{tpu_custom_call.1} parent=11 // pred_region
          %s70 = ssub.s32 128, 128
          %71 = vsyncadd [#allocation3], %s70
          %s73 = sshll.u32 [#allocation2], 4
          %s74 = int_to_ptr.vmem [resolvable:$true] %s73
          %76 = dma.hbm_to_vmem [thread:$0]  %s0, 128, %s74, [#allocation3]
        $region16: #{tpu_custom_call.1} parent=11 // pred_fallthru
          _
      $region12: #{tpu_custom_call.1} parent=5 // pred_fallthru
        _
      %p77 = scmp.lt.s32.totalorder %s9, 2
      // Predicated region
      $region17: #{tpu_custom_call.1} parent=5 // pred_check
        %p78 = pneg %p77
      $region18: #{tpu_custom_call.1} parent=5 // pred_check_branch
        %80 = sbr.rel (%p78) target = $region20
      $region19: #{tpu_custom_call.1} parent=5 // pred_region
        _
      $region20: #{tpu_custom_call.1} parent=5 // pred_fallthru
        _
      %p81 = scmp.le.s32.totalorder 1, %s9
      %p82 = scmp.lt.s32.totalorder %s9, 3
      %p83 = pnand %p81, %p82
      %p84 = pneg %p83
      // Predicated region
      $region21: #{tpu_custom_call.1} parent=5 // pred_check
        _
      $region22: #{tpu_custom_call.1} parent=5 // pred_check_branch
        %86 = sbr.rel (%p83) target = $region24
      $region23: #{tpu_custom_call.1} parent=5 // pred_region
        %s87 = ssub.s32 %s9, 1
        // Predicated region
        $region25: #{tpu_custom_call.1} parent=23 // pred_check
          %p88 = pneg %p30
        $region26: #{tpu_custom_call.1} parent=23 // pred_check_branch
          %90 = sbr.rel (%p88) target = $region28
        $region27: #{tpu_custom_call.1} parent=23 // pred_region
          %91 = dma.done [#allocation3], 128
        $region28: #{tpu_custom_call.1} parent=23 // pred_fallthru
          _
        %p92 = pneg %p30
        %p93 = pneg %p27
        %p94 = pneg %p51
        %p95 = pneg %p48
        %v96 = vld [vmem:[#allocation2] sm:$0xff]
        %97 = vst [vmem:[#allocation5] sm:$0xff] %v96
        // Predicated region
        $region29: #{tpu_custom_call.1} parent=23 // pred_check
          %p98 = pneg %p48
        $region30: #{tpu_custom_call.1} parent=23 // pred_check_branch
          %100 = sbr.rel (%p98) target = $region32
        $region31: #{tpu_custom_call.1} parent=23 // pred_region
          %s102 = ssub.s32 128, 128
          %103 = vsyncadd [#allocation4], %s102
          %s105 = sshll.u32 [#allocation5], 4
          %s106 = int_to_ptr.vmem [resolvable:$true] %s105
          %108 = dma.vmem_to_hbm [thread:$0]  %s106, 128, %s1, [#allocation4]
        $region32: #{tpu_custom_call.1} parent=23 // pred_fallthru
          _
        // Predicated region
        $region33: #{tpu_custom_call.1} parent=23 // pred_check
          %p109 = pneg %p48
        $region34: #{tpu_custom_call.1} parent=23 // pred_check_branch
          %111 = sbr.rel (%p109) target = $region36
        $region35: #{tpu_custom_call.1} parent=23 // pred_region
          %112 = dma.done [#allocation4], 128
        $region36: #{tpu_custom_call.1} parent=23 // pred_fallthru
          _
      $region24: #{tpu_custom_call.1} parent=5 // pred_fallthru
        _
      %p113 = scmp.le.s32.totalorder 2, %s9
      // Predicated region
      $region37: #{tpu_custom_call.1} parent=5 // pred_check
        %p114 = pneg %p113
      $region38: #{tpu_custom_call.1} parent=5 // pred_check_branch
        %116 = sbr.rel (%p114) target = $region40
      $region39: #{tpu_custom_call.1} parent=5 // pred_region
        %s117 = ssub.s32 %s9, 2
      $region40: #{tpu_custom_call.1} parent=5 // pred_fallthru
        _
    $region6: #{tpu_custom_call.1} parent=1 // loop_footer
      %s13 = sadd.s32 1, %s9
    $region7: #{tpu_custom_call.1} parent=1 // loop_footer_branch
      %8 = sbr.rel target = $region3
    $region8: #{tpu_custom_call.1} parent=1 // loop_exit
      _
    %118 = vsyncpa [#allocation3], 1
    %s119 = scalar_lea.sflag [#allocation3], 1
    %120 = vsyncpa %s119, 1
    %121 = vsyncpa [#allocation4], 1
    %s122 = scalar_lea.sflag [#allocation4], 1
    %123 = vsyncpa %s122, 1

// kernel: _ffn_impl.1
$region0: #{_ffn_impl.1}
  #allocation0 [shape = 'u32[]', space=smem, size = 0x4, offset = 0x4, fixed_abs, tag = 'smem constant byte address 0x4 - core index']
  #allocation1 [shape = 'u32[144,128]{1,0:T(1,128)}', space=vmem, size = 0x12000, scoped, tag = 'internal scratch']
  %s0 = inlined_call_operand.vmem [shape: f32[16,128], index: 0, kind: input, shape index: {}]
  %s1 = inlined_call_operand.vmem [shape: bf16[128,128], index: 1, kind: input, shape index: {}]
  %s2 = inlined_call_operand.vmem [shape: f32[1,128], index: 2, kind: input, shape index: {}]
  %s3 = inlined_call_operand.vmem [shape: bf16[128,128], index: 3, kind: input, shape index: {}]
  %s4 = inlined_call_operand.vmem [shape: f32[1,128], index: 4, kind: input, shape index: {}]
  %s5 = inlined_call_operand.hbm [shape: f32[16,128], index: 5, kind: output, shape index: {}]
  %s6 = sld [smem:[#allocation0]]
  $region53: #{_ffn_impl.1} parent=0
    _
  %s8 = ssub.s32 1, %s6
  %s9 = scalar_select 0, %s8, %s6
  $region1: #{_ffn_impl.1} parent=0
    #allocation2 [shape = 'u8[8192]{0}', space=vmem, size = 0x2000, scoped, tag = 'output window, operand 0']
    #allocation3 [shape = 's32[2]{0}', space=sflag, size = 0x8, scoped, tag = 'scoped memory for _ffn_impl.1']
    %10 = vsyncpa [#allocation3], 0
    %s11 = scalar_lea.sflag [#allocation3], 1
    %12 = vsyncpa %s11, 0
    loop: start=0, step=1, limit=4
    $region2: #{_ffn_impl.1} parent=1 // loop_pre_header
      _
    $region3: #{_ffn_impl.1} parent=1 // loop_header
      %s14 = sphi 0, %s18
      %p15 = scmp.ge.s32.totalorder %s14, 4
      %s24 = sphi 0, %s26
      %s27 = sphi 0, %s24
      %s28 = sphi 0, %s27
      %s44 = sphi 0, %s28
      %s48 = sphi 0, %s48
      %s50 = sphi 0, %s48
      %s51 = sphi 0, %s50
      %s65 = sphi 0, %s51
      %s69 = sphi 0, %s69
      %s71 = sphi 0, %s69
      %s72 = sphi 0, %s71
      %s86 = sphi 0, %s72
      %s90 = sphi 0, %s90
      %s92 = sphi 0, %s90
      %s93 = sphi 0, %s92
      %s107 = sphi 0, %s93
      %s111 = sphi 0, %s111
      %s113 = sphi 0, %s111
      %s114 = sphi 0, %s113
      %s128 = sphi 0, %s114
      %s134 = sphi 0, %s136
      %s137 = sphi 0, %s134
      %s138 = sphi 0, %s137
      %s154 = sphi 0, %s138
    $region4: #{_ffn_impl.1} parent=1 // loop_header_branch
      %17 = sbr.rel (%p15) target = $region8
    $region5: #{_ffn_impl.1} parent=1 // loop_body
      %s19 = ssub.s32 %s14, 1
      %s20 = ssub.s32 %s14, 2
      %s21 = sadd.s32 %s14, 1
      %s22 = ssub.s32 %s14, %s21
      %p23 = scmp.eq.s32.totalorder %s22, 0
      %s25 = sadd.s32 %s24, 1
      %s26 = scalar_select %p23, %s24, %s25
      %p29 = pneg %p23
      %p30 = scmp.eq.s32.totalorder %s14, 1
      %p31 = por %p29, %p30
      %p32 = scmp.ne.s32.totalorder %s24, %s27
      %p33 = scmp.eq.s32.totalorder %s14, 0
      %p34 = por %p32, %p33
      %p35 = scmp.ne.s32.totalorder %s24, %s27
      %p36 = scmp.eq.s32.totalorder %s19, 1
      %p37 = por %p35, %p36
      %p38 = scmp.ne.s32.totalorder %s27, %s28
      %p39 = scmp.eq.s32.totalorder %s19, 0
      %p40 = por %p38, %p39
      %p41 = scmp.ne.s32.totalorder %s27, %s28
      %p42 = scmp.eq.s32.totalorder %s20, 1
      %p43 = por %p41, %p42
      %p45 = scmp.ne.s32.totalorder %s28, %s44
      %p46 = scmp.eq.s32.totalorder %s20, 0
      %p47 = por %p45, %p46
      %s49 = sadd.s32 %s48, 1
      %p52 = scmp.eq.s32.totalorder %s14, 1
      %p53 = scmp.ne.s32.totalorder %s48, %s50
      %p54 = scmp.eq.s32.totalorder %s14, 0
      %p55 = por %p53, %p54
      %p56 = scmp.ne.s32.totalorder %s48, %s50
      %p57 = scmp.eq.s32.totalorder %s19, 1
      %p58 = por %p56, %p57
      %p59 = scmp.ne.s32.totalorder %s50, %s51
      %p60 = scmp.eq.s32.totalorder %s19, 0
      %p61 = por %p59, %p60
      %p62 = scmp.ne.s32.totalorder %s50, %s51
      %p63 = scmp.eq.s32.totalorder %s20, 1
      %p64 = por %p62, %p63
      %p66 = scmp.ne.s32.totalorder %s51, %s65
      %p67 = scmp.eq.s32.totalorder %s20, 0
      %p68 = por %p66, %p67
      %s70 = sadd.s32 %s69, 1
      %p73 = scmp.eq.s32.totalorder %s14, 1
      %p74 = scmp.ne.s32.totalorder %s69, %s71
      %p75 = scmp.eq.s32.totalorder %s14, 0
      %p76 = por %p74, %p75
      %p77 = scmp.ne.s32.totalorder %s69, %s71
      %p78 = scmp.eq.s32.totalorder %s19, 1
      %p79 = por %p77, %p78
      %p80 = scmp.ne.s32.totalorder %s71, %s72
      %p81 = scmp.eq.s32.totalorder %s19, 0
      %p82 = por %p80, %p81
      %p83 = scmp.ne.s32.totalorder %s71, %s72
      %p84 = scmp.eq.s32.totalorder %s20, 1
      %p85 = por %p83, %p84
      %p87 = scmp.ne.s32.totalorder %s72, %s86
      %p88 = scmp.eq.s32.totalorder %s20, 0
      %p89 = por %p87, %p88
      %s91 = sadd.s32 %s90, 1
      %p94 = scmp.eq.s32.totalorder %s14, 1
      %p95 = scmp.ne.s32.totalorder %s90, %s92
      %p96 = scmp.eq.s32.totalorder %s14, 0
      %p97 = por %p95, %p96
      %p98 = scmp.ne.s32.totalorder %s90, %s92
      %p99 = scmp.eq.s32.totalorder %s19, 1
      %p100 = por %p98, %p99
      %p101 = scmp.ne.s32.totalorder %s92, %s93
      %p102 = scmp.eq.s32.totalorder %s19, 0
      %p103 = por %p101, %p102
      %p104 = scmp.ne.s32.totalorder %s92, %s93
      %p105 = scmp.eq.s32.totalorder %s20, 1
      %p106 = por %p104, %p105
      %p108 = scmp.ne.s32.totalorder %s93, %s107
      %p109 = scmp.eq.s32.totalorder %s20, 0
      %p110 = por %p108, %p109
      %s112 = sadd.s32 %s111, 1
      %p115 = scmp.eq.s32.totalorder %s14, 1
      %p116 = scmp.ne.s32.totalorder %s111, %s113
      %p117 = scmp.eq.s32.totalorder %s14, 0
      %p118 = por %p116, %p117
      %p119 = scmp.ne.s32.totalorder %s111, %s113
      %p120 = scmp.eq.s32.totalorder %s19, 1
      %p121 = por %p119, %p120
      %p122 = scmp.ne.s32.totalorder %s113, %s114
      %p123 = scmp.eq.s32.totalorder %s19, 0
      %p124 = por %p122, %p123
      %p125 = scmp.ne.s32.totalorder %s113, %s114
      %p126 = scmp.eq.s32.totalorder %s20, 1
      %p127 = por %p125, %p126
      %p129 = scmp.ne.s32.totalorder %s114, %s128
      %p130 = scmp.eq.s32.totalorder %s20, 0
      %p131 = por %p129, %p130
      %s132 = ssub.s32 %s14, %s21
      %p133 = scmp.eq.s32.totalorder %s132, 0
      %s135 = sadd.s32 %s134, 1
      %s136 = scalar_select %p133, %s134, %s135
      %p139 = pneg %p133
      %p140 = scmp.eq.s32.totalorder %s14, 1
      %p141 = por %p139, %p140
      %p142 = scmp.ne.s32.totalorder %s134, %s137
      %p143 = scmp.eq.s32.totalorder %s14, 0
      %p144 = por %p142, %p143
      %p145 = scmp.ne.s32.totalorder %s134, %s137
      %p146 = scmp.eq.s32.totalorder %s19, 1
      %p147 = por %p145, %p146
      %p148 = scmp.ne.s32.totalorder %s137, %s138
      %p149 = scmp.eq.s32.totalorder %s19, 0
      %p150 = por %p148, %p149
      %p151 = scmp.ne.s32.totalorder %s137, %s138
      %p152 = scmp.eq.s32.totalorder %s20, 1
      %p153 = por %p151, %p152
      %p155 = scmp.ne.s32.totalorder %s138, %s154
      %p156 = scmp.eq.s32.totalorder %s20, 0
      %p157 = por %p155, %p156
      %p158 = scmp.le.s32.totalorder 1, %s14
      %p159 = scmp.lt.s32.totalorder %s14, 3
      %p160 = pnand %p158, %p159
      %p161 = pneg %p160
      // Predicated region
      $region9: #{_ffn_impl.1} parent=5 // pred_check
        _
      $region10: #{_ffn_impl.1} parent=5 // pred_check_branch
        %163 = sbr.rel (%p160) target = $region12
      $region11: #{_ffn_impl.1} parent=5 // pred_region
        %s164 = ssub.s32 %s14, 1
        // Predicated region
        $region13: #{_ffn_impl.1} parent=11 // pred_check
          %p165 = pneg %p61
        $region14: #{_ffn_impl.1} parent=11 // pred_check_branch
          %167 = sbr.rel (%p165) target = $region16
        $region15: #{_ffn_impl.1} parent=11 // pred_region
          _
        $region16: #{_ffn_impl.1} parent=11 // pred_fallthru
          _
        // Predicated region
        $region17: #{_ffn_impl.1} parent=11 // pred_check
          %p168 = pneg %p82
        $region18: #{_ffn_impl.1} parent=11 // pred_check_branch
          %170 = sbr.rel (%p168) target = $region20
        $region19: #{_ffn_impl.1} parent=11 // pred_region
          _
        $region20: #{_ffn_impl.1} parent=11 // pred_fallthru
          _
        // Predicated region
        $region21: #{_ffn_impl.1} parent=11 // pred_check
          %p171 = pneg %p103
        $region22: #{_ffn_impl.1} parent=11 // pred_check_branch
          %173 = sbr.rel (%p171) target = $region24
        $region23: #{_ffn_impl.1} parent=11 // pred_region
          _
        $region24: #{_ffn_impl.1} parent=11 // pred_fallthru
          _
        // Predicated region
        $region25: #{_ffn_impl.1} parent=11 // pred_check
          %p174 = pneg %p124
        $region26: #{_ffn_impl.1} parent=11 // pred_check_branch
          %176 = sbr.rel (%p174) target = $region28
        $region27: #{_ffn_impl.1} parent=11 // pred_region
          _
        $region28: #{_ffn_impl.1} parent=11 // pred_fallthru
          _
      $region12: #{_ffn_impl.1} parent=5 // pred_fallthru
        _
      %p177 = scmp.lt.s32.totalorder %s14, 2
      // Predicated region
      $region29: #{_ffn_impl.1} parent=5 // pred_check
        %p178 = pneg %p177
      $region30: #{_ffn_impl.1} parent=5 // pred_check_branch
        %180 = sbr.rel (%p178) target = $region32
      $region31: #{_ffn_impl.1} parent=5 // pred_region
        // Predicated region
        $region33: #{_ffn_impl.1} parent=31 // pred_check
          %p181 = pneg %p34
        $region34: #{_ffn_impl.1} parent=31 // pred_check_branch
          %183 = sbr.rel (%p181) target = $region36
        $region35: #{_ffn_impl.1} parent=31 // pred_region
          %p184 = scmp.lt.s32.totalorder %s14, 1
          %s185 = scalar_select %p184, %s14, 1
          %s186 = smul.addr %s185, 8
          %s187 = scalar_lea.vmem %s0, %s186
        $region36: #{_ffn_impl.1} parent=31 // pred_fallthru
          _
      $region32: #{_ffn_impl.1} parent=5 // pred_fallthru
        _
      %p188 = scmp.le.s32.totalorder 1, %s14
      %p189 = scmp.lt.s32.totalorder %s14, 3
      %p190 = pnand %p188, %p189
      %p191 = pneg %p190
      // Predicated region
      $region37: #{_ffn_impl.1} parent=5 // pred_check
        _
      $region38: #{_ffn_impl.1} parent=5 // pred_check_branch
        %193 = sbr.rel (%p190) target = $region40
      $region39: #{_ffn_impl.1} parent=5 // pred_region
        %s194 = ssub.s32 %s14, 1
        %p195 = scmp.lt.s32.totalorder %s19, 1
        %s196 = scalar_select %p195, %s19, 1
        %s197 = smul.addr %s196, 8
        %s198 = scalar_lea.vmem %s0, %s197
        %p199 = pneg %p40
        %p200 = pneg %p37
        %p201 = pneg %p61
        %p202 = pneg %p58
        %p203 = pneg %p82
        %p204 = pneg %p79
        %p205 = pneg %p103
        %p206 = pneg %p100
        %p207 = pneg %p124
        %p208 = pneg %p121
        %p209 = pneg %p150
        %p210 = pneg %p147
        %s211 = sand.u32 %s137, 1
        %s212 = scalar_lea.sflag [#allocation3], %s211
        %s213 = sand.u32 %s137, 1
        %s214 = smul.addr %s213, 8
        %s215 = scalar_lea.vmem [#allocation2], %s214
        %p216 = scmp.lt.s32.totalorder %s19, 1
        %s217 = scalar_select %p216, %s19, 1
        %s218 = smul.addr %s217, 8
        %s219 = scalar_lea.vmem %s0, %s218
        %v221 = vld [vmem:[%s219] sm:$0xff]
        %v222 = vpack.c.bf16 %v221, %v221
        %v223 = vld [vmem:[%s1] sm:$0xf]
        %v224 = vld [vmem:[%s1 + $0x4] sm:$0xf]
        %v225 = vld [vmem:[%s1 + $0x8] sm:$0xf]
        %v226 = vld [vmem:[%s1 + $0xc] sm:$0xf]
        %v227 = vld [vmem:[%s1 + $0x10] sm:$0xf]
        %v228 = vld [vmem:[%s1 + $0x14] sm:$0xf]
        %v229 = vld [vmem:[%s1 + $0x18] sm:$0xf]
        %v230 = vld [vmem:[%s1 + $0x1c] sm:$0xf]
        %v231 = vld [vmem:[%s1 + $0x20] sm:$0xf]
        %v232 = vld [vmem:[%s1 + $0x24] sm:$0xf]
        %v233 = vld [vmem:[%s1 + $0x28] sm:$0xf]
        %v234 = vld [vmem:[%s1 + $0x2c] sm:$0xf]
        %v235 = vld [vmem:[%s1 + $0x30] sm:$0xf]
        %v236 = vld [vmem:[%s1 + $0x34] sm:$0xf]
        %v237 = vld [vmem:[%s1 + $0x38] sm:$0xf]
        %v238 = vld [vmem:[%s1 + $0x3c] sm:$0xf]
        %v239 = vld [vmem:[%s2] sm:$0x1]
        %v241 = vlaneseq
        %v242 = vshrl.u32 %v241, 7
        %v243 = vsub.s32 0, %v242
        %v244 = vrot.slane %v239, %v243
        %v262 = vunpack.c.l.b16 %v223
        %v263 = vunpack.c.l.b16 %v224
        %v264 = vunpack.c.l.b16 %v225
        %v265 = vunpack.c.l.b16 %v226
        %v266 = vunpack.c.l.b16 %v227
        %v267 = vunpack.c.l.b16 %v228
        %v268 = vunpack.c.l.b16 %v229
        %v269 = vunpack.c.l.b16 %v230
        %v270 = vunpack.c.l.b16 %v231
        %v271 = vunpack.c.l.b16 %v232
        %v272 = vunpack.c.l.b16 %v233
        %v273 = vunpack.c.l.b16 %v234
        %v274 = vunpack.c.l.b16 %v235
        %v275 = vunpack.c.l.b16 %v236
        %v276 = vunpack.c.l.b16 %v237
        %v277 = vunpack.c.l.b16 %v238
        %v278 = vpack.c.b16 %v263, %v262
        %v279 = vpack.c.b16 %v265, %v264
        %v280 = vpack.c.b16 %v267, %v266
        %v281 = vpack.c.b16 %v269, %v268
        %v282 = vpack.c.b16 %v271, %v270
        %v283 = vpack.c.b16 %v273, %v272
        %v284 = vpack.c.b16 %v275, %v274
        %v285 = vpack.c.b16 %v277, %v276
        %294 = vmatprep.subr.bf16.mxu0 0
        %295 = vmatpush1.bf16.msra.mxu0 %v278
        %296 = vmatprep.subr.bf16.mxu0 0
        %297 = vmatpush1.bf16.msra.mxu0 %v279
        %298 = vmatprep.subr.bf16.mxu0 0
        %299 = vmatpush1.bf16.msra.mxu0 %v280
        %300 = vmatprep.subr.bf16.mxu0 0
        %301 = vmatpush1.bf16.msra.mxu0 %v281
        %302 = vmatprep.subr.bf16.mxu0 0
        %303 = vmatpush1.bf16.msra.mxu0 %v282
        %304 = vmatprep.subr.bf16.mxu0 0
        %305 = vmatpush1.bf16.msra.mxu0 %v283
        %306 = vmatprep.subr.bf16.mxu0 0
        %307 = vmatpush1.bf16.msra.mxu0 %v284
        %308 = vmatprep.subr.bf16.mxu0 0
        %309 = vmatpush1.bf16.msra.mxu0 %v285
        %310 = vmatprep.subr.bf16.mxu0 0
        %311 = vmatpush1.bf16.msra.mxu0 0
        %312 = vmatprep.subr.bf16.mxu0 0
        %313 = vmatpush1.bf16.msra.mxu0 0
        %314 = vmatprep.subr.bf16.mxu0 0
        %315 = vmatpush1.bf16.msra.mxu0 0
        %316 = vmatprep.subr.bf16.mxu0 0
        %317 = vmatpush1.bf16.msra.mxu0 0
        %318 = vmatprep.subr.bf16.mxu0 0
        %319 = vmatpush1.bf16.msra.mxu0 0
        %320 = vmatprep.subr.bf16.mxu0 0
        %321 = vmatpush1.bf16.msra.mxu0 0
        %322 = vmatprep.subr.bf16.mxu0 0
        %323 = vmatpush1.bf16.msra.mxu0 0
        %324 = vmatprep.subr.bf16.mxu0 0
        %325 = vmatpush1.bf16.msra.mxu0 0
        %326 = vmatprep.mubr.bf16.mxu0 0
        %327 = vmatmul.mubr.bf16.gmra.mrb[0].mxu0 %v222
        %v328 = vpop.f32.mrb[0].mxu0
        %v329 = vadd.f32 %v244, %v328
        %v330 = vpop.f32.mrb[0].mxu0
        %v331 = vpop.f32.mrb[0].mxu0
        %v332 = vpop.f32.mrb[0].mxu0
        %333 = vdwg.mxu0
        %v334 = vmax.f32 %v329, 0.0
        %v335 = vpack.c.bf16 %v334, %v334
        %v336 = vld [vmem:[%s3] sm:$0xf]
        %v337 = vld [vmem:[%s3 + $0x4] sm:$0xf]
        %v338 = vld [vmem:[%s3 + $0x8] sm:$0xf]
        %v339 = vld [vmem:[%s3 + $0xc] sm:$0xf]
        %v340 = vld [vmem:[%s3 + $0x10] sm:$0xf]
        %v341 = vld [vmem:[%s3 + $0x14] sm:$0xf]
        %v342 = vld [vmem:[%s3 + $0x18] sm:$0xf]
        %v343 = vld [vmem:[%s3 + $0x1c] sm:$0xf]
        %v344 = vld [vmem:[%s3 + $0x20] sm:$0xf]
        %v345 = vld [vmem:[%s3 + $0x24] sm:$0xf]
        %v346 = vld [vmem:[%s3 + $0x28] sm:$0xf]
        %v347 = vld [vmem:[%s3 + $0x2c] sm:$0xf]
        %v348 = vld [vmem:[%s3 + $0x30] sm:$0xf]
        %v349 = vld [vmem:[%s3 + $0x34] sm:$0xf]
        %v350 = vld [vmem:[%s3 + $0x38] sm:$0xf]
        %v351 = vld [vmem:[%s3 + $0x3c] sm:$0xf]
        %v352 = vld [vmem:[%s4] sm:$0x1]
        %v354 = vlaneseq
        %v355 = vshrl.u32 %v354, 7
        %v356 = vsub.s32 0, %v355
        %v357 = vrot.slane %v352, %v356
        %v375 = vunpack.c.l.b16 %v336
        %v376 = vunpack.c.l.b16 %v337
        %v377 = vunpack.c.l.b16 %v338
        %v378 = vunpack.c.l.b16 %v339
        %v379 = vunpack.c.l.b16 %v340
        %v380 = vunpack.c.l.b16 %v341
        %v381 = vunpack.c.l.b16 %v342
        %v382 = vunpack.c.l.b16 %v343
        %v383 = vunpack.c.l.b16 %v344
        %v384 = vunpack.c.l.b16 %v345
        %v385 = vunpack.c.l.b16 %v346
        %v386 = vunpack.c.l.b16 %v347
        %v387 = vunpack.c.l.b16 %v348
        %v388 = vunpack.c.l.b16 %v349
        %v389 = vunpack.c.l.b16 %v350
        %v390 = vunpack.c.l.b16 %v351
        %v391 = vpack.c.b16 %v376, %v375
        %v392 = vpack.c.b16 %v378, %v377
        %v393 = vpack.c.b16 %v380, %v379
        %v394 = vpack.c.b16 %v382, %v381
        %v395 = vpack.c.b16 %v384, %v383
        %v396 = vpack.c.b16 %v386, %v385
        %v397 = vpack.c.b16 %v388, %v387
        %v398 = vpack.c.b16 %v390, %v389
        %407 = vmatprep.subr.bf16.mxu0 0
        %408 = vmatpush1.bf16.msra.mxu0 %v391
        %409 = vmatprep.subr.bf16.mxu0 0
        %410 = vmatpush1.bf16.msra.mxu0 %v392
        %411 = vmatprep.subr.bf16.mxu0 0
        %412 = vmatpush1.bf16.msra.mxu0 %v393
        %413 = vmatprep.subr.bf16.mxu0 0
        %414 = vmatpush1.bf16.msra.mxu0 %v394
        %415 = vmatprep.subr.bf16.mxu0 0
        %416 = vmatpush1.bf16.msra.mxu0 %v395
        %417 = vmatprep.subr.bf16.mxu0 0
        %418 = vmatpush1.bf16.msra.mxu0 %v396
        %419 = vmatprep.subr.bf16.mxu0 0
        %420 = vmatpush1.bf16.msra.mxu0 %v397
        %421 = vmatprep.subr.bf16.mxu0 0
        %422 = vmatpush1.bf16.msra.mxu0 %v398
        %423 = vmatprep.subr.bf16.mxu0 0
        %424 = vmatpush1.bf16.msra.mxu0 0
        %425 = vmatprep.subr.bf16.mxu0 0
        %426 = vmatpush1.bf16.msra.mxu0 0
        %427 = vmatprep.subr.bf16.mxu0 0
        %428 = vmatpush1.bf16.msra.mxu0 0
        %429 = vmatprep.subr.bf16.mxu0 0
        %430 = vmatpush1.bf16.msra.mxu0 0
        %431 = vmatprep.subr.bf16.mxu0 0
        %432 = vmatpush1.bf16.msra.mxu0 0
        %433 = vmatprep.subr.bf16.mxu0 0
        %434 = vmatpush1.bf16.msra.mxu0 0
        %435 = vmatprep.subr.bf16.mxu0 0
        %436 = vmatpush1.bf16.msra.mxu0 0
        %437 = vmatprep.subr.bf16.mxu0 0
        %438 = vmatpush1.bf16.msra.mxu0 0
        %439 = vmatprep.mubr.bf16.mxu0 0
        %440 = vmatmul.mubr.bf16.gmra.mrb[0].mxu0 %v335
        %v441 = vpop.f32.mrb[0].mxu0
        %v442 = vadd.f32 %v357, %v441
        %v443 = vpop.f32.mrb[0].mxu0
        %v444 = vpop.f32.mrb[0].mxu0
        %v445 = vpop.f32.mrb[0].mxu0
        %446 = vdwg.mxu0
        %447 = vst [vmem:[%s215] sm:$0xff] %v442
        %s448 = sand.u32 %s137, 1
        %s449 = scalar_lea.sflag [#allocation3], %s448
        %s450 = sand.u32 %s137, 1
        %s451 = smul.addr %s450, 8
        %s452 = scalar_lea.vmem [#allocation2], %s451
        // Predicated region
        $region41: #{_ffn_impl.1} parent=39 // pred_check
          %p453 = pneg %p147
        $region42: #{_ffn_impl.1} parent=39 // pred_check_branch
          %455 = sbr.rel (%p453) target = $region44
        $region43: #{_ffn_impl.1} parent=39 // pred_region
          %s457 = ssub.s32 128, 128
          %458 = vsyncadd %s449, %s457
          %s459 = smul.addr %s19, 128
          %s460 = scalar_lea.hbm %s5, %s459
          %s462 = sshll.u32 %s452, 4
          %s463 = int_to_ptr.vmem [resolvable:$true] %s462
          %465 = dma.vmem_to_hbm [thread:$0]  %s463, 128, %s460, %s449
        $region44: #{_ffn_impl.1} parent=39 // pred_fallthru
          _
      $region40: #{_ffn_impl.1} parent=5 // pred_fallthru
        _
      %p466 = scmp.le.s32.totalorder 2, %s14
      // Predicated region
      $region45: #{_ffn_impl.1} parent=5 // pred_check
        %p467 = pneg %p466
      $region46: #{_ffn_impl.1} parent=5 // pred_check_branch
        %469 = sbr.rel (%p467) target = $region48
      $region47: #{_ffn_impl.1} parent=5 // pred_region
        %s470 = ssub.s32 %s14, 2
        // Predicated region
        $region49: #{_ffn_impl.1} parent=47 // pred_check
          %p471 = pneg %p153
        $region50: #{_ffn_impl.1} parent=47 // pred_check_branch
          %473 = sbr.rel (%p471) target = $region52
        $region51: #{_ffn_impl.1} parent=47 // pred_region
          %s474 = sand.u32 %s138, 1
          %s475 = scalar_lea.sflag [#allocation3], %s474
          %s476 = sand.u32 %s138, 1
          %s477 = smul.addr %s476, 8
          %s478 = scalar_lea.vmem [#allocation2], %s477
          %479 = dma.done %s475, 128
        $region52: #{_ffn_impl.1} parent=47 // pred_fallthru
          _
      $region48: #{_ffn_impl.1} parent=5 // pred_fallthru
        _
    $region6: #{_ffn_impl.1} parent=1 // loop_footer
      %s18 = sadd.s32 1, %s14
    $region7: #{_ffn_impl.1} parent=1 // loop_footer_branch
      %13 = sbr.rel target = $region3
    $region8: #{_ffn_impl.1} parent=1 // loop_exit
      _
    %480 = vsyncpa [#allocation3], 1
    %s481 = scalar_lea.sflag [#allocation3], 1
    %482 = vsyncpa %s481, 1

</llo_original>
